<compile_context>
chip_gen: v6e
topology: v6e:2x2x1
jax: 0.10.0
libtpu: 0.0.40
codegen_flags: <defaults>
</compile_context>

<pallas_src>
import functools

import jax
import jax.numpy as jnp
from jax.experimental import pallas as pl
from jax.experimental.pallas import tpu as pltpu


# ----------------------------- kernel -------------------------------------- #

def _layernorm_relu(h):
    """ReLU(LayerNorm(h)), no affine params, eps=1e-5.

    Two-pass variance (E[(h-mean)^2]) exactly as torch LayerNorm computes it —
    robust to large-magnitude inputs (review correctness concern)."""
    inv_n = 1.0 / h.shape[-1]
    mean = jnp.sum(h, axis=-1, keepdims=True) * inv_n
    centered = h - mean
    var = jnp.sum(centered * centered, axis=-1, keepdims=True) * inv_n
    return jnp.maximum(centered * jax.lax.rsqrt(var + 1e-5), 0.0)


def _encoder_batch_kernel(xs_ref, w_in_ref, w_seq_ref, w_head_ref, bias_ref,
                          out_ref, *, h_dim, z2_dim):
    # bias slab layout: row 0 = b_in, rows 1..L = b_seq[l], row L+1 = [b_mu|b_lv]
    num_hidden = w_seq_ref.shape[0]          # static -> fully unrolled loop

    # --- x2h: one matmul on the (wrapper-)concatenated [x, s] --------------- #
    h = jnp.dot(xs_ref[...], w_in_ref[...], preferred_element_type=jnp.float32)
    h = _layernorm_relu(h + bias_ref[0:1, :h_dim])

    # --- seq_nn: (num_h_layers - 1) stacked LinearReLU(h_dim, h_dim) -------- #
    for l in range(num_hidden):
        g = jnp.dot(h, w_seq_ref[l], preferred_element_type=jnp.float32)
        h = _layernorm_relu(g + bias_ref[1 + l:2 + l, :h_dim])

    # --- fused heads: [mu | logvar] = one matmul, one lane-denser output ---- #
    out = jnp.dot(h, w_head_ref[...], preferred_element_type=jnp.float32)
    out = out + bias_ref[1 + num_hidden:2 + num_hidden, :z2_dim]
    out_ref[...] = out.astype(out_ref.dtype)


# ----------------------------- wrapper -------------------------------------- #

def _full_spec(shape):
    # single full-array block resident in VMEM
    return pl.BlockSpec(shape, lambda: tuple(0 for _ in shape),
                        memory_space=pltpu.VMEM)


def encoder_batch_forward(params, x, s):
    """(mu, logvar) = EncoderBatch(x, s) — one fused Pallas kernel launch."""
    xs = jnp.concatenate([x, s], axis=-1)     # apply_with_batch concat
    w_in = params["w_in"]                     # [x_feat + s_feat, h_dim]
    w_seq = params["w_seq"]                   # [L, h_dim, h_dim]
    w_head = params["w_head"]                 # [h_dim, 2*z_dim] = [w_mu | w_lv]
    bias = params["bias"]                     # [L+2, max(h_dim, 2*z_dim)]

    B = xs.shape[0]
    h_dim = w_in.shape[1]
    z2 = w_head.shape[1]
    z_dim = z2 // 2

    args = (xs, w_in, w_seq, w_head, bias)
    out = pl.pallas_call(
        functools.partial(_encoder_batch_kernel, h_dim=h_dim, z2_dim=z2),
        out_shape=jax.ShapeDtypeStruct((B, z2), jnp.float32),
        grid=(),
        in_specs=[_full_spec(a.shape) for a in args],
        out_specs=_full_spec((B, z2)),
    )(*args)
    # split the fused head outside the kernel (review: single output, split here)
    return out[:, :z_dim], out[:, z_dim:]


# ----------------------------- params --------------------------------------- #

def init_encoder_batch_params(key, num_h_layers, x_dim, h_dim, z_dim):
    """Deterministic synthetic params (PyTorch nn.Linear-style init), packed
    ONCE at init time into the kernel-ready layout:
      w_in   [x_dim, h_dim]                (x_dim = x_feat + s_feat, [in, out])
      w_seq  [L, h_dim, h_dim]
      w_head [h_dim, 2*z_dim]              ([w_mu | w_lv])
      bias   [L+2, max(h_dim, 2*z_dim)]    (row0=b_in, rows1..L=b_seq, last=[b_mu|b_lv])
    """
    assert num_h_layers >= 2, "need at least one hidden (seq) layer"
    num_hidden = num_h_layers - 1
    keys = jax.random.split(key, 2 * (num_hidden + 3))

    def lin(kw, kb, din, dout):
        scale = 1.0 / jnp.sqrt(jnp.float32(din))
        w = jax.random.uniform(kw, (din, dout), jnp.float32, -scale, scale)
        b = jax.random.uniform(kb, (dout,), jnp.float32, -scale, scale)
        return w, b

    w_in, b_in = lin(keys[0], keys[1], x_dim, h_dim)

    seq_w, seq_b = [], []
    for i in range(num_hidden):
        w, b = lin(keys[2 + 2 * i], keys[3 + 2 * i], h_dim, h_dim)
        seq_w.append(w)
        seq_b.append(b)

    k0 = 2 + 2 * num_hidden
    w_mu, b_mu = lin(keys[k0], keys[k0 + 1], h_dim, z_dim)
    w_lv, b_lv = lin(keys[k0 + 2], keys[k0 + 3], h_dim, z_dim)

    z2 = 2 * z_dim
    pad = max(h_dim, z2)

    def pad_row(v):
        return jnp.pad(v, (0, pad - v.shape[0]))

    bias = jnp.stack(
        [pad_row(b_in)]
        + [pad_row(b) for b in seq_b]
        + [pad_row(jnp.concatenate([b_mu, b_lv]))],
        axis=0,
    )

    return {
        "w_in": w_in,
        "w_seq": jnp.stack(seq_w, 0),
        "w_head": jnp.concatenate([w_mu, w_lv], axis=1),
        "bias": bias,
    }


# ----------------------------- pure-JAX reference --------------------------- #

def _reference_forward(params, x, s):
    xs = jnp.concatenate([x, s], axis=-1)
    h_dim = params["w_in"].shape[1]
    z2 = params["w_head"].shape[1]

    def lin_ln_relu(h, w, b):
        h = h @ w + b
        mean = jnp.mean(h, axis=-1, keepdims=True)
        var = jnp.mean((h - mean) ** 2, axis=-1, keepdims=True)
        h = (h - mean) / jnp.sqrt(var + 1e-5)
        return jnp.maximum(h, 0.0)

    h = lin_ln_relu(xs, params["w_in"], params["bias"][0, :h_dim])
    for l in range(params["w_seq"].shape[0]):
        h = lin_ln_relu(h, params["w_seq"][l], params["bias"][1 + l, :h_dim])
    out = h @ params["w_head"] + params["bias"][-1, :z2]
    z = z2 // 2
    return out[:, :z], out[:, z:]


# ----------------------------- main ------------------------------------------ #

if __name__ == "__main__":
    num_h_layers = 3
    x_feat, s_feat = 16, 4          # data features + one-hot batch label s
    h_dim, z_dim = 32, 8
    batch = 8
    # TODO(synk): if callers can stack rows to B >= 128/256, add a parallel
    # batch grid axis so v7x's second TensorCore / the MXU M dim are used.

    key = jax.random.PRNGKey(0)
    k_params, k_x, k_s = jax.random.split(key, 3)
    params = init_encoder_batch_params(k_params, num_h_layers,
                                       x_feat + s_feat, h_dim, z_dim)
    x = jax.random.normal(k_x, (batch, x_feat), dtype=jnp.float32)
    s_idx = jax.random.randint(k_s, (batch,), 0, s_feat)
    s = jax.nn.one_hot(s_idx, s_feat, dtype=jnp.float32)

    fwd = jax.jit(encoder_batch_forward)
    mu, logvar = fwd(params, x, s)
    jax.block_until_ready((mu, logvar))

    assert mu.shape == (batch, z_dim) and logvar.shape == (batch, z_dim)

    # validate against a pure-JAX reference of the PyTorch forward
    mu_ref, lv_ref = _reference_forward(params, x, s)
    assert bool(jnp.allclose(mu, mu_ref, atol=1e-4, rtol=1e-4))
    assert bool(jnp.allclose(logvar, lv_ref, atol=1e-4, rtol=1e-4))
    print("KERNEL_OK")
</pallas_src>

<mosaic_0001>
module attributes {stable_mosaic.version = 11 : i64} {
  func.func @_encoder_batch_kernel(%arg0: memref<8x20xf32, #tpu.memory_space<vmem>>, %arg1: memref<20x32xf32, #tpu.memory_space<vmem>>, %arg2: memref<2x32x32xf32, #tpu.memory_space<vmem>>, %arg3: memref<32x16xf32, #tpu.memory_space<vmem>>, %arg4: memref<4x32xf32, #tpu.memory_space<vmem>>, %arg5: memref<8x16xf32, #tpu.memory_space<vmem>>) attributes {dimension_semantics = [], scalar_prefetch = 0 : i64, scratch_operands = 0 : i64, tpu.core_type = #tpu.core_type<tc>} {
    %c0 = arith.constant 0 : index
    %c0_0 = arith.constant 0 : index
    %0 = vector.load %arg0[%c0, %c0_0] : memref<8x20xf32, #tpu.memory_space<vmem>>, vector<8x20xf32>
    %c0_1 = arith.constant 0 : index
    %c0_2 = arith.constant 0 : index
    %1 = vector.load %arg1[%c0_1, %c0_2] : memref<20x32xf32, #tpu.memory_space<vmem>>, vector<20x32xf32>
    %cst = arith.constant dense<0.000000e+00> : vector<8x32xf32>
    %2 = tpu.matmul %0, %1, %cst {dimension_numbers = #tpu.dot_dimension_numbers<[1], [0], [0], [1], [0, 0, 1, 1], [], []>} : vector<8x20xf32>, vector<20x32xf32>, vector<8x32xf32> -> vector<8x32xf32>
    %c0_3 = arith.constant 0 : index
    %c0_4 = arith.constant 0 : index
    %3 = vector.load %arg4[%c0_3, %c0_4] : memref<4x32xf32, #tpu.memory_space<vmem>>, vector<1x32xf32>
    %4 = vector.broadcast %3 : vector<1x32xf32> to vector<8x32xf32>
    %5 = arith.addf %2, %4 : vector<8x32xf32>
    %cst_5 = arith.constant dense<0.000000e+00> : vector<8xf32>
    %6 = vector.multi_reduction <add>, %5, %cst_5 [1] : vector<8x32xf32> to vector<8xf32>
    %7 = vector.shape_cast %6 : vector<8xf32> to vector<8x1xf32>
    %cst_6 = arith.constant 3.125000e-02 : f32
    %8 = vector.broadcast %cst_6 : f32 to vector<8x1xf32>
    %9 = arith.mulf %7, %8 : vector<8x1xf32>
    %10 = vector.broadcast %9 : vector<8x1xf32> to vector<8x32xf32>
    %11 = arith.subf %5, %10 : vector<8x32xf32>
    %12 = arith.mulf %11, %11 : vector<8x32xf32>
    %cst_7 = arith.constant dense<0.000000e+00> : vector<8xf32>
    %13 = vector.multi_reduction <add>, %12, %cst_7 [1] : vector<8x32xf32> to vector<8xf32>
    %14 = vector.shape_cast %13 : vector<8xf32> to vector<8x1xf32>
    %cst_8 = arith.constant 3.125000e-02 : f32
    %15 = vector.broadcast %cst_8 : f32 to vector<8x1xf32>
    %16 = arith.mulf %14, %15 : vector<8x1xf32>
    %cst_9 = arith.constant 9.99999974E-6 : f32
    %17 = vector.broadcast %cst_9 : f32 to vector<8x1xf32>
    %18 = arith.addf %16, %17 : vector<8x1xf32>
    %19 = math.rsqrt %18 : vector<8x1xf32>
    %20 = vector.broadcast %19 : vector<8x1xf32> to vector<8x32xf32>
    %21 = arith.mulf %11, %20 : vector<8x32xf32>
    %cst_10 = arith.constant 0.000000e+00 : f32
    %22 = vector.broadcast %cst_10 : f32 to vector<8x32xf32>
    %23 = arith.maximumf %21, %22 : vector<8x32xf32>
    %c0_11 = arith.constant 0 : index
    %c0_12 = arith.constant 0 : index
    %c0_13 = arith.constant 0 : index
    %24 = vector.load %arg2[%c0_11, %c0_12, %c0_13] : memref<2x32x32xf32, #tpu.memory_space<vmem>>, vector<1x32x32xf32>
    %25 = vector.shape_cast %24 : vector<1x32x32xf32> to vector<32x32xf32>
    %cst_14 = arith.constant dense<0.000000e+00> : vector<8x32xf32>
    %26 = tpu.matmul %23, %25, %cst_14 {dimension_numbers = #tpu.dot_dimension_numbers<[1], [0], [0], [1], [0, 0, 1, 1], [], []>} : vector<8x32xf32>, vector<32x32xf32>, vector<8x32xf32> -> vector<8x32xf32>
    %c1 = arith.constant 1 : index
    %c0_15 = arith.constant 0 : index
    %27 = vector.load %arg4[%c1, %c0_15] : memref<4x32xf32, #tpu.memory_space<vmem>>, vector<1x32xf32>
    %28 = vector.broadcast %27 : vector<1x32xf32> to vector<8x32xf32>
    %29 = arith.addf %26, %28 : vector<8x32xf32>
    %cst_16 = arith.constant dense<0.000000e+00> : vector<8xf32>
    %30 = vector.multi_reduction <add>, %29, %cst_16 [1] : vector<8x32xf32> to vector<8xf32>
    %31 = vector.shape_cast %30 : vector<8xf32> to vector<8x1xf32>
    %cst_17 = arith.constant 3.125000e-02 : f32
    %32 = vector.broadcast %cst_17 : f32 to vector<8x1xf32>
    %33 = arith.mulf %31, %32 : vector<8x1xf32>
    %34 = vector.broadcast %33 : vector<8x1xf32> to vector<8x32xf32>
    %35 = arith.subf %29, %34 : vector<8x32xf32>
    %36 = arith.mulf %35, %35 : vector<8x32xf32>
    %cst_18 = arith.constant dense<0.000000e+00> : vector<8xf32>
    %37 = vector.multi_reduction <add>, %36, %cst_18 [1] : vector<8x32xf32> to vector<8xf32>
    %38 = vector.shape_cast %37 : vector<8xf32> to vector<8x1xf32>
    %cst_19 = arith.constant 3.125000e-02 : f32
    %39 = vector.broadcast %cst_19 : f32 to vector<8x1xf32>
    %40 = arith.mulf %38, %39 : vector<8x1xf32>
    %cst_20 = arith.constant 9.99999974E-6 : f32
    %41 = vector.broadcast %cst_20 : f32 to vector<8x1xf32>
    %42 = arith.addf %40, %41 : vector<8x1xf32>
    %43 = math.rsqrt %42 : vector<8x1xf32>
    %44 = vector.broadcast %43 : vector<8x1xf32> to vector<8x32xf32>
    %45 = arith.mulf %35, %44 : vector<8x32xf32>
    %cst_21 = arith.constant 0.000000e+00 : f32
    %46 = vector.broadcast %cst_21 : f32 to vector<8x32xf32>
    %47 = arith.maximumf %45, %46 : vector<8x32xf32>
    %c1_22 = arith.constant 1 : index
    %c0_23 = arith.constant 0 : index
    %c0_24 = arith.constant 0 : index
    %48 = vector.load %arg2[%c1_22, %c0_23, %c0_24] : memref<2x32x32xf32, #tpu.memory_space<vmem>>, vector<1x32x32xf32>
    %49 = vector.shape_cast %48 : vector<1x32x32xf32> to vector<32x32xf32>
    %cst_25 = arith.constant dense<0.000000e+00> : vector<8x32xf32>
    %50 = tpu.matmul %47, %49, %cst_25 {dimension_numbers = #tpu.dot_dimension_numbers<[1], [0], [0], [1], [0, 0, 1, 1], [], []>} : vector<8x32xf32>, vector<32x32xf32>, vector<8x32xf32> -> vector<8x32xf32>
    %c2 = arith.constant 2 : index
    %c0_26 = arith.constant 0 : index
    %51 = vector.load %arg4[%c2, %c0_26] : memref<4x32xf32, #tpu.memory_space<vmem>>, vector<1x32xf32>
    %52 = vector.broadcast %51 : vector<1x32xf32> to vector<8x32xf32>
    %53 = arith.addf %50, %52 : vector<8x32xf32>
    %cst_27 = arith.constant dense<0.000000e+00> : vector<8xf32>
    %54 = vector.multi_reduction <add>, %53, %cst_27 [1] : vector<8x32xf32> to vector<8xf32>
    %55 = vector.shape_cast %54 : vector<8xf32> to vector<8x1xf32>
    %cst_28 = arith.constant 3.125000e-02 : f32
    %56 = vector.broadcast %cst_28 : f32 to vector<8x1xf32>
    %57 = arith.mulf %55, %56 : vector<8x1xf32>
    %58 = vector.broadcast %57 : vector<8x1xf32> to vector<8x32xf32>
    %59 = arith.subf %53, %58 : vector<8x32xf32>
    %60 = arith.mulf %59, %59 : vector<8x32xf32>
    %cst_29 = arith.constant dense<0.000000e+00> : vector<8xf32>
    %61 = vector.multi_reduction <add>, %60, %cst_29 [1] : vector<8x32xf32> to vector<8xf32>
    %62 = vector.shape_cast %61 : vector<8xf32> to vector<8x1xf32>
    %cst_30 = arith.constant 3.125000e-02 : f32
    %63 = vector.broadcast %cst_30 : f32 to vector<8x1xf32>
    %64 = arith.mulf %62, %63 : vector<8x1xf32>
    %cst_31 = arith.constant 9.99999974E-6 : f32
    %65 = vector.broadcast %cst_31 : f32 to vector<8x1xf32>
    %66 = arith.addf %64, %65 : vector<8x1xf32>
    %67 = math.rsqrt %66 : vector<8x1xf32>
    %68 = vector.broadcast %67 : vector<8x1xf32> to vector<8x32xf32>
    %69 = arith.mulf %59, %68 : vector<8x32xf32>
    %cst_32 = arith.constant 0.000000e+00 : f32
    %70 = vector.broadcast %cst_32 : f32 to vector<8x32xf32>
    %71 = arith.maximumf %69, %70 : vector<8x32xf32>
    %c0_33 = arith.constant 0 : index
    %c0_34 = arith.constant 0 : index
    %72 = vector.load %arg3[%c0_33, %c0_34] : memref<32x16xf32, #tpu.memory_space<vmem>>, vector<32x16xf32>
    %cst_35 = arith.constant dense<0.000000e+00> : vector<8x16xf32>
    %73 = tpu.matmul %71, %72, %cst_35 {dimension_numbers = #tpu.dot_dimension_numbers<[1], [0], [0], [1], [0, 0, 1, 1], [], []>} : vector<8x32xf32>, vector<32x16xf32>, vector<8x16xf32> -> vector<8x16xf32>
    %c3 = arith.constant 3 : index
    %c0_36 = arith.constant 0 : index
    %74 = vector.load %arg4[%c3, %c0_36] : memref<4x32xf32, #tpu.memory_space<vmem>>, vector<1x16xf32>
    %75 = vector.broadcast %74 : vector<1x16xf32> to vector<8x16xf32>
    %76 = arith.addf %73, %75 : vector<8x16xf32>
    %c0_37 = arith.constant 0 : index
    %c0_38 = arith.constant 0 : index
    %77 = vector.load %arg5[%c0_37, %c0_38] : memref<8x16xf32, #tpu.memory_space<vmem>>, vector<8x16xf32>
    tpu.vector_store %arg5[%c0_37, %c0_38], %76 {strides = array<i32>} : memref<8x16xf32, #tpu.memory_space<vmem>>, vector<8x16xf32>,
    return
  }
}

</mosaic_0001>

<llo_original>
// kernel: encoder_batch_forward.1
$region0: #{encoder_batch_forward.1}
  #allocation0 [shape = 'u32[]', space=smem, size = 0x4, offset = 0x4, fixed_abs, tag = 'smem constant byte address 0x4 - core index']
  #allocation1 [shape = 'u32[144,128]{1,0:T(1,128)}', space=vmem, size = 0x12000, scoped, tag = 'internal scratch']
  %s0 = inlined_call_operand.vmem [shape: f32[8,20], index: 0, kind: input, shape index: {}]
  %s1 = inlined_call_operand.vmem [shape: f32[20,32], index: 1, kind: input, shape index: {}]
  %s2 = inlined_call_operand.vmem [shape: f32[2,32,32], index: 2, kind: input, shape index: {}]
  %s3 = inlined_call_operand.vmem [shape: f32[32,16], index: 3, kind: input, shape index: {}]
  %s4 = inlined_call_operand.hbm [shape: f32[4,32], index: 4, kind: input, shape index: {}]
  %s5 = inlined_call_operand.vmem [shape: f32[8,16], index: 5, kind: output, shape index: {}]
  %s6 = sld [smem:[#allocation0]]
  $region34: #{encoder_batch_forward.1} parent=0
    _
  %s8 = ssub.s32 1, %s6
  %s9 = scalar_select 0, %s8, %s6
  $region1: #{encoder_batch_forward.1} parent=0
    #allocation2 [shape = 'u8[2048]{0}', space=vmem, size = 0x800, scoped, tag = 'input window, operand 4, single buffered']
    #allocation3 [shape = 's32[1]{0}', space=sflag, size = 0x4, scoped, tag = 'scoped memory for encoder_batch_forward.1']
    %10 = vsyncpa [#allocation3], 0
    // Predicated region
    $region2: #{encoder_batch_forward.1} parent=1 // pred_check
      _
    $region3: #{encoder_batch_forward.1} parent=1 // pred_check_branch
      %12 = sbr.rel (0) target = $region5
    $region4: #{encoder_batch_forward.1} parent=1 // pred_region
      _
    $region5: #{encoder_batch_forward.1} parent=1 // pred_fallthru
      _
    // Predicated region
    $region6: #{encoder_batch_forward.1} parent=1 // pred_check
      _
    $region7: #{encoder_batch_forward.1} parent=1 // pred_check_branch
      %14 = sbr.rel (0) target = $region9
    $region8: #{encoder_batch_forward.1} parent=1 // pred_region
      _
    $region9: #{encoder_batch_forward.1} parent=1 // pred_fallthru
      _
    // Predicated region
    $region10: #{encoder_batch_forward.1} parent=1 // pred_check
      _
    $region11: #{encoder_batch_forward.1} parent=1 // pred_check_branch
      %16 = sbr.rel (0) target = $region13
    $region12: #{encoder_batch_forward.1} parent=1 // pred_region
      _
    $region13: #{encoder_batch_forward.1} parent=1 // pred_fallthru
      _
    // Predicated region
    $region14: #{encoder_batch_forward.1} parent=1 // pred_check
      _
    $region15: #{encoder_batch_forward.1} parent=1 // pred_check_branch
      %18 = sbr.rel (0) target = $region17
    $region16: #{encoder_batch_forward.1} parent=1 // pred_region
      _
    $region17: #{encoder_batch_forward.1} parent=1 // pred_fallthru
      _
    // Predicated region
    $region18: #{encoder_batch_forward.1} parent=1 // pred_check
      _
    $region19: #{encoder_batch_forward.1} parent=1 // pred_check_branch
      %20 = sbr.rel (0) target = $region21
    $region20: #{encoder_batch_forward.1} parent=1 // pred_region
      %s22 = ssub.s32 64, 64
      %23 = vsyncadd [#allocation3], %s22
      %s25 = sshll.u32 [#allocation2], 4
      %s26 = int_to_ptr.vmem [resolvable:$true] %s25
      %28 = dma.hbm_to_vmem [thread:$0]  %s4, 64, %s26, [#allocation3]
    $region21: #{encoder_batch_forward.1} parent=1 // pred_fallthru
      _
    // Predicated region
    $region22: #{encoder_batch_forward.1} parent=1 // pred_check
      _
    $region23: #{encoder_batch_forward.1} parent=1 // pred_check_branch
      %30 = sbr.rel (0) target = $region25
    $region24: #{encoder_batch_forward.1} parent=1 // pred_region
      %31 = dma.done [#allocation3], 64
    $region25: #{encoder_batch_forward.1} parent=1 // pred_fallthru
      _
    %v32 = vld [vmem:[%s0] sm:$0xff]
    %v33 = vld [vmem:[%s1] sm:$0xff]
    %v34 = vld [vmem:[%s1 + $0x8] sm:$0xff]
    %v35 = vld [vmem:[%s1 + $0x10] sm:$0xf]
    %v36 = vld [vmem:[#allocation2] sm:$0x1]
    %v37 = vlaneseq
    %v38 = vshrl.u32 %v37, 7
    %v39 = vsub.s32 0, %v38
    %v40 = vrot.slane %v36, %v39
    %vm41 = vcmask 162816
    %v43 = vsel %vm41, %v32, 0
    %vm45 = vcmask 1043456
    %v47 = vsel %vm45, %v35, 0
    %49 = vmatprep.subr.mxu0 0.0
    %50 = vmatpush1.msra.mxu0 0.0
    %51 = vmatprep.subr.mxu0 0.0
    %52 = vmatpush1.msra.mxu0 0.0
    %53 = vmatprep.subr.mxu0 0.0
    %54 = vmatpush1.msra.mxu0 0.0
    %55 = vmatprep.subr.mxu0 0.0
    %56 = vmatpush1.msra.mxu0 0.0
    %57 = vmatprep.subr.mxu0 0.0
    %58 = vmatpush1.msra.mxu0 0.0
    %59 = vmatprep.subr.mxu0 0.0
    %60 = vmatpush1.msra.mxu0 0.0
    %61 = vmatprep.subr.mxu0 0.0
    %62 = vmatpush1.msra.mxu0 0.0
    %63 = vmatprep.subr.mxu0 0.0
    %64 = vmatpush1.msra.mxu0 0.0
    %65 = vmatprep.subr.mxu0 0.0
    %66 = vmatpush1.msra.mxu0 0.0
    %67 = vmatprep.subr.mxu0 0.0
    %68 = vmatpush1.msra.mxu0 0.0
    %69 = vmatprep.subr.mxu0 0.0
    %70 = vmatpush1.msra.mxu0 0.0
    %71 = vmatprep.subr.mxu0 0.0
    %72 = vmatpush1.msra.mxu0 0.0
    %73 = vmatprep.subr.mxu0 0.0
    %74 = vmatpush1.msra.mxu0 0.0
    %75 = vmatprep.subr.mxu0 0.0
    %76 = vmatpush1.msra.mxu0 %v47
    %77 = vmatprep.subr.mxu0 0.0
    %78 = vmatpush1.msra.mxu0 %v34
    %79 = vmatprep.subr.mxu0 0.0
    %80 = vmatpush1.msra.mxu0 %v33
    %81 = vmatprep.subr.mxu0 0.0
    %82 = vmatpush2.msra.mxu0 0.0
    %83 = vmatprep.subr.mxu0 0.0
    %84 = vmatpush2.msra.mxu0 0.0
    %85 = vmatprep.subr.mxu0 0.0
    %86 = vmatpush2.msra.mxu0 0.0
    %87 = vmatprep.subr.mxu0 0.0
    %88 = vmatpush2.msra.mxu0 0.0
    %89 = vmatprep.subr.mxu0 0.0
    %90 = vmatpush2.msra.mxu0 0.0
    %91 = vmatprep.subr.mxu0 0.0
    %92 = vmatpush2.msra.mxu0 0.0
    %93 = vmatprep.subr.mxu0 0.0
    %94 = vmatpush2.msra.mxu0 0.0
    %95 = vmatprep.subr.mxu0 0.0
    %96 = vmatpush2.msra.mxu0 0.0
    %97 = vmatprep.subr.mxu0 0.0
    %98 = vmatpush2.msra.mxu0 0.0
    %99 = vmatprep.subr.mxu0 0.0
    %100 = vmatpush2.msra.mxu0 0.0
    %101 = vmatprep.subr.mxu0 0.0
    %102 = vmatpush2.msra.mxu0 0.0
    %103 = vmatprep.subr.mxu0 0.0
    %104 = vmatpush2.msra.mxu0 0.0
    %105 = vmatprep.subr.mxu0 0.0
    %106 = vmatpush2.msra.mxu0 0.0
    %107 = vmatprep.subr.mxu0 0.0
    %108 = vmatpush2.msra.mxu0 0.0
    %109 = vmatprep.subr.mxu0 0.0
    %110 = vmatpush2.msra.mxu0 0.0
    %111 = vmatprep.subr.mxu0 0.0
    %112 = vmatpush2.msra.mxu0 0.0
    %113 = vmatprep.mubr.f32.mxu0 0.0
    %114 = vmatmul.mubr.f32.gmra.mxu0 %v43
    %v115 = vpop.f32.mrf.mxu0
    %v116 = vadd.f32 %v40, %v115
    %v117 = vpop.f32.mrf.mxu0
    %118 = vdwg.mxu0
    %vm119 = vcmask 261120
    %v120 = vsel %vm119, %v116, 0.0
    %121 = vadd.xlane.f32.xlu0 %v120
    %v122 = vpop.xlane.xlu0 %121
    %v123 = vmul.f32 %v122, 0.03125
    %v124 = vsub.f32 %v116, %v123
    %v125 = vmul.f32 %v124, %v124
    %v126 = vsel %vm119, %v125, 0.0
    %127 = vadd.xlane.f32.xlu0 %v126
    %v128 = vpop.xlane.xlu0 %127
    %v129 = vmul.f32 %v128, 0.03125
    %v130 = vadd.f32 %v129, 1e-05
    %v131 = vrsqrt.pop %v130
    %v132 = vmul.f32 %v124, %v131
    %v133 = vmax.f32 %v132, 0.0
    %v134 = vld [vmem:[%s2] sm:$0xff]
    %v135 = vld [vmem:[%s2 + $0x8] sm:$0xff]
    %v136 = vld [vmem:[%s2 + $0x10] sm:$0xff]
    %v137 = vld [vmem:[%s2 + $0x18] sm:$0xff]
    %v138 = vld [vmem:[#allocation2 + $0x1] sm:$0x1]
    %v139 = vlaneseq
    %v140 = vshrl.u32 %v139, 7
    %v141 = vsub.s32 0, %v140
    %v142 = vrot.slane %v138, %v141
    %v144 = vsel %vm119, %v133, 0
    %146 = vmatprep.subr.mxu0 0.0
    %147 = vmatpush1.msra.mxu0 0.0
    %148 = vmatprep.subr.mxu0 0.0
    %149 = vmatpush1.msra.mxu0 0.0
    %150 = vmatprep.subr.mxu0 0.0
    %151 = vmatpush1.msra.mxu0 0.0
    %152 = vmatprep.subr.mxu0 0.0
    %153 = vmatpush1.msra.mxu0 0.0
    %154 = vmatprep.subr.mxu0 0.0
    %155 = vmatpush1.msra.mxu0 0.0
    %156 = vmatprep.subr.mxu0 0.0
    %157 = vmatpush1.msra.mxu0 0.0
    %158 = vmatprep.subr.mxu0 0.0
    %159 = vmatpush1.msra.mxu0 0.0
    %160 = vmatprep.subr.mxu0 0.0
    %161 = vmatpush1.msra.mxu0 0.0
    %162 = vmatprep.subr.mxu0 0.0
    %163 = vmatpush1.msra.mxu0 0.0
    %164 = vmatprep.subr.mxu0 0.0
    %165 = vmatpush1.msra.mxu0 0.0
    %166 = vmatprep.subr.mxu0 0.0
    %167 = vmatpush1.msra.mxu0 0.0
    %168 = vmatprep.subr.mxu0 0.0
    %169 = vmatpush1.msra.mxu0 0.0
    %170 = vmatprep.subr.mxu0 0.0
    %171 = vmatpush1.msra.mxu0 %v137
    %172 = vmatprep.subr.mxu0 0.0
    %173 = vmatpush1.msra.mxu0 %v136
    %174 = vmatprep.subr.mxu0 0.0
    %175 = vmatpush1.msra.mxu0 %v135
    %176 = vmatprep.subr.mxu0 0.0
    %177 = vmatpush1.msra.mxu0 %v134
    %178 = vmatprep.subr.mxu0 0.0
    %179 = vmatpush2.msra.mxu0 0.0
    %180 = vmatprep.subr.mxu0 0.0
    %181 = vmatpush2.msra.mxu0 0.0
    %182 = vmatprep.subr.mxu0 0.0
    %183 = vmatpush2.msra.mxu0 0.0
    %184 = vmatprep.subr.mxu0 0.0
    %185 = vmatpush2.msra.mxu0 0.0
    %186 = vmatprep.subr.mxu0 0.0
    %187 = vmatpush2.msra.mxu0 0.0
    %188 = vmatprep.subr.mxu0 0.0
    %189 = vmatpush2.msra.mxu0 0.0
    %190 = vmatprep.subr.mxu0 0.0
    %191 = vmatpush2.msra.mxu0 0.0
    %192 = vmatprep.subr.mxu0 0.0
    %193 = vmatpush2.msra.mxu0 0.0
    %194 = vmatprep.subr.mxu0 0.0
    %195 = vmatpush2.msra.mxu0 0.0
    %196 = vmatprep.subr.mxu0 0.0
    %197 = vmatpush2.msra.mxu0 0.0
    %198 = vmatprep.subr.mxu0 0.0
    %199 = vmatpush2.msra.mxu0 0.0
    %200 = vmatprep.subr.mxu0 0.0
    %201 = vmatpush2.msra.mxu0 0.0
    %202 = vmatprep.subr.mxu0 0.0
    %203 = vmatpush2.msra.mxu0 0.0
    %204 = vmatprep.subr.mxu0 0.0
    %205 = vmatpush2.msra.mxu0 0.0
    %206 = vmatprep.subr.mxu0 0.0
    %207 = vmatpush2.msra.mxu0 0.0
    %208 = vmatprep.subr.mxu0 0.0
    %209 = vmatpush2.msra.mxu0 0.0
    %210 = vmatprep.mubr.f32.mxu0 0.0
    %211 = vmatmul.mubr.f32.gmra.mxu0 %v144
    %v212 = vpop.f32.mrf.mxu0
    %v213 = vadd.f32 %v142, %v212
    %v214 = vpop.f32.mrf.mxu0
    %215 = vdwg.mxu0
    %v216 = vsel %vm119, %v213, 0.0
    %217 = vadd.xlane.f32.xlu0 %v216
    %v218 = vpop.xlane.xlu0 %217
    %v219 = vmul.f32 %v218, 0.03125
    %v220 = vsub.f32 %v213, %v219
    %v221 = vmul.f32 %v220, %v220
    %v222 = vsel %vm119, %v221, 0.0
    %223 = vadd.xlane.f32.xlu0 %v222
    %v224 = vpop.xlane.xlu0 %223
    %v225 = vmul.f32 %v224, 0.03125
    %v226 = vadd.f32 %v225, 1e-05
    %v227 = vrsqrt.pop %v226
    %v228 = vmul.f32 %v220, %v227
    %v229 = vmax.f32 %v228, 0.0
    %s230 = scalar_lea.vmem %s2, 32
    %v231 = vld [vmem:[%s230] sm:$0xff]
    %v232 = vld [vmem:[%s230 + $0x8] sm:$0xff]
    %v233 = vld [vmem:[%s230 + $0x10] sm:$0xff]
    %v234 = vld [vmem:[%s230 + $0x18] sm:$0xff]
    %v235 = vld [vmem:[#allocation2 + $0x2] sm:$0x1]
    %v236 = vlaneseq
    %v237 = vshrl.u32 %v236, 7
    %v238 = vsub.s32 0, %v237
    %v239 = vrot.slane %v235, %v238
    %v241 = vsel %vm119, %v229, 0
    %243 = vmatprep.subr.mxu0 0.0
    %244 = vmatpush1.msra.mxu0 0.0
    %245 = vmatprep.subr.mxu0 0.0
    %246 = vmatpush1.msra.mxu0 0.0
    %247 = vmatprep.subr.mxu0 0.0
    %248 = vmatpush1.msra.mxu0 0.0
    %249 = vmatprep.subr.mxu0 0.0
    %250 = vmatpush1.msra.mxu0 0.0
    %251 = vmatprep.subr.mxu0 0.0
    %252 = vmatpush1.msra.mxu0 0.0
    %253 = vmatprep.subr.mxu0 0.0
    %254 = vmatpush1.msra.mxu0 0.0
    %255 = vmatprep.subr.mxu0 0.0
    %256 = vmatpush1.msra.mxu0 0.0
    %257 = vmatprep.subr.mxu0 0.0
    %258 = vmatpush1.msra.mxu0 0.0
    %259 = vmatprep.subr.mxu0 0.0
    %260 = vmatpush1.msra.mxu0 0.0
    %261 = vmatprep.subr.mxu0 0.0
    %262 = vmatpush1.msra.mxu0 0.0
    %263 = vmatprep.subr.mxu0 0.0
    %264 = vmatpush1.msra.mxu0 0.0
    %265 = vmatprep.subr.mxu0 0.0
    %266 = vmatpush1.msra.mxu0 0.0
    %267 = vmatprep.subr.mxu0 0.0
    %268 = vmatpush1.msra.mxu0 %v234
    %269 = vmatprep.subr.mxu0 0.0
    %270 = vmatpush1.msra.mxu0 %v233
    %271 = vmatprep.subr.mxu0 0.0
    %272 = vmatpush1.msra.mxu0 %v232
    %273 = vmatprep.subr.mxu0 0.0
    %274 = vmatpush1.msra.mxu0 %v231
    %275 = vmatprep.subr.mxu0 0.0
    %276 = vmatpush2.msra.mxu0 0.0
    %277 = vmatprep.subr.mxu0 0.0
    %278 = vmatpush2.msra.mxu0 0.0
    %279 = vmatprep.subr.mxu0 0.0
    %280 = vmatpush2.msra.mxu0 0.0
    %281 = vmatprep.subr.mxu0 0.0
    %282 = vmatpush2.msra.mxu0 0.0
    %283 = vmatprep.subr.mxu0 0.0
    %284 = vmatpush2.msra.mxu0 0.0
    %285 = vmatprep.subr.mxu0 0.0
    %286 = vmatpush2.msra.mxu0 0.0
    %287 = vmatprep.subr.mxu0 0.0
    %288 = vmatpush2.msra.mxu0 0.0
    %289 = vmatprep.subr.mxu0 0.0
    %290 = vmatpush2.msra.mxu0 0.0
    %291 = vmatprep.subr.mxu0 0.0
    %292 = vmatpush2.msra.mxu0 0.0
    %293 = vmatprep.subr.mxu0 0.0
    %294 = vmatpush2.msra.mxu0 0.0
    %295 = vmatprep.subr.mxu0 0.0
    %296 = vmatpush2.msra.mxu0 0.0
    %297 = vmatprep.subr.mxu0 0.0
    %298 = vmatpush2.msra.mxu0 0.0
    %299 = vmatprep.subr.mxu0 0.0
    %300 = vmatpush2.msra.mxu0 0.0
    %301 = vmatprep.subr.mxu0 0.0
    %302 = vmatpush2.msra.mxu0 0.0
    %303 = vmatprep.subr.mxu0 0.0
    %304 = vmatpush2.msra.mxu0 0.0
    %305 = vmatprep.subr.mxu0 0.0
    %306 = vmatpush2.msra.mxu0 0.0
    %307 = vmatprep.mubr.f32.mxu0 0.0
    %308 = vmatmul.mubr.f32.gmra.mxu0 %v241
    %v309 = vpop.f32.mrf.mxu0
    %v310 = vadd.f32 %v239, %v309
    %v311 = vpop.f32.mrf.mxu0
    %312 = vdwg.mxu0
    %v313 = vsel %vm119, %v310, 0.0
    %314 = vadd.xlane.f32.xlu0 %v313
    %v315 = vpop.xlane.xlu0 %314
    %v316 = vmul.f32 %v315, 0.03125
    %v317 = vsub.f32 %v310, %v316
    %v318 = vmul.f32 %v317, %v317
    %v319 = vsel %vm119, %v318, 0.0
    %320 = vadd.xlane.f32.xlu0 %v319
    %v321 = vpop.xlane.xlu0 %320
    %v322 = vmul.f32 %v321, 0.03125
    %v323 = vadd.f32 %v322, 1e-05
    %v324 = vrsqrt.pop %v323
    %v325 = vmul.f32 %v317, %v324
    %v326 = vmax.f32 %v325, 0.0
    %v327 = vld [vmem:[%s3] sm:$0xff]
    %v328 = vld [vmem:[%s3 + $0x8] sm:$0xff]
    %v329 = vld [vmem:[%s3 + $0x10] sm:$0xff]
    %v330 = vld [vmem:[%s3 + $0x18] sm:$0xff]
    %v331 = vld [vmem:[#allocation2 + $0x3] sm:$0x1]
    %v332 = vlaneseq
    %v333 = vshrl.u32 %v332, 7
    %v334 = vsub.s32 0, %v333
    %v335 = vrot.slane %v331, %v334
    %v337 = vsel %vm119, %v326, 0
    %339 = vmatprep.subr.mxu0 0.0
    %340 = vmatpush1.msra.mxu0 0.0
    %341 = vmatprep.subr.mxu0 0.0
    %342 = vmatpush1.msra.mxu0 0.0
    %343 = vmatprep.subr.mxu0 0.0
    %344 = vmatpush1.msra.mxu0 0.0
    %345 = vmatprep.subr.mxu0 0.0
    %346 = vmatpush1.msra.mxu0 0.0
    %347 = vmatprep.subr.mxu0 0.0
    %348 = vmatpush1.msra.mxu0 0.0
    %349 = vmatprep.subr.mxu0 0.0
    %350 = vmatpush1.msra.mxu0 0.0
    %351 = vmatprep.subr.mxu0 0.0
    %352 = vmatpush1.msra.mxu0 0.0
    %353 = vmatprep.subr.mxu0 0.0
    %354 = vmatpush1.msra.mxu0 0.0
    %355 = vmatprep.subr.mxu0 0.0
    %356 = vmatpush1.msra.mxu0 0.0
    %357 = vmatprep.subr.mxu0 0.0
    %358 = vmatpush1.msra.mxu0 0.0
    %359 = vmatprep.subr.mxu0 0.0
    %360 = vmatpush1.msra.mxu0 0.0
    %361 = vmatprep.subr.mxu0 0.0
    %362 = vmatpush1.msra.mxu0 0.0
    %363 = vmatprep.subr.mxu0 0.0
    %364 = vmatpush1.msra.mxu0 %v330
    %365 = vmatprep.subr.mxu0 0.0
    %366 = vmatpush1.msra.mxu0 %v329
    %367 = vmatprep.subr.mxu0 0.0
    %368 = vmatpush1.msra.mxu0 %v328
    %369 = vmatprep.subr.mxu0 0.0
    %370 = vmatpush1.msra.mxu0 %v327
    %371 = vmatprep.subr.mxu0 0.0
    %372 = vmatpush2.msra.mxu0 0.0
    %373 = vmatprep.subr.mxu0 0.0
    %374 = vmatpush2.msra.mxu0 0.0
    %375 = vmatprep.subr.mxu0 0.0
    %376 = vmatpush2.msra.mxu0 0.0
    %377 = vmatprep.subr.mxu0 0.0
    %378 = vmatpush2.msra.mxu0 0.0
    %379 = vmatprep.subr.mxu0 0.0
    %380 = vmatpush2.msra.mxu0 0.0
    %381 = vmatprep.subr.mxu0 0.0
    %382 = vmatpush2.msra.mxu0 0.0
    %383 = vmatprep.subr.mxu0 0.0
    %384 = vmatpush2.msra.mxu0 0.0
    %385 = vmatprep.subr.mxu0 0.0
    %386 = vmatpush2.msra.mxu0 0.0
    %387 = vmatprep.subr.mxu0 0.0
    %388 = vmatpush2.msra.mxu0 0.0
    %389 = vmatprep.subr.mxu0 0.0
    %390 = vmatpush2.msra.mxu0 0.0
    %391 = vmatprep.subr.mxu0 0.0
    %392 = vmatpush2.msra.mxu0 0.0
    %393 = vmatprep.subr.mxu0 0.0
    %394 = vmatpush2.msra.mxu0 0.0
    %395 = vmatprep.subr.mxu0 0.0
    %396 = vmatpush2.msra.mxu0 0.0
    %397 = vmatprep.subr.mxu0 0.0
    %398 = vmatpush2.msra.mxu0 0.0
    %399 = vmatprep.subr.mxu0 0.0
    %400 = vmatpush2.msra.mxu0 0.0
    %401 = vmatprep.subr.mxu0 0.0
    %402 = vmatpush2.msra.mxu0 0.0
    %403 = vmatprep.mubr.f32.mxu0 0.0
    %404 = vmatmul.mubr.f32.gmra.mxu0 %v337
    %v405 = vpop.f32.mrf.mxu0
    %v406 = vadd.f32 %v335, %v405
    %v407 = vpop.f32.mrf.mxu0
    %408 = vdwg.mxu0
    %vm409 = vcmask 130048
    %410 = vst.msk [vmem:[%s5] sm:$0xff] %vm409, %v406
    // Predicated region
    $region26: #{encoder_batch_forward.1} parent=1 // pred_check
      _
    $region27: #{encoder_batch_forward.1} parent=1 // pred_check_branch
      %412 = sbr.rel (0) target = $region29
    $region28: #{encoder_batch_forward.1} parent=1 // pred_region
      _
    $region29: #{encoder_batch_forward.1} parent=1 // pred_fallthru
      _
    // Predicated region
    $region30: #{encoder_batch_forward.1} parent=1 // pred_check
      _
    $region31: #{encoder_batch_forward.1} parent=1 // pred_check_branch
      %414 = sbr.rel (0) target = $region33
    $region32: #{encoder_batch_forward.1} parent=1 // pred_region
      _
    $region33: #{encoder_batch_forward.1} parent=1 // pred_fallthru
      _
    %415 = vsyncpa [#allocation3], 1

</llo_original>
